<compile_context>
chip_gen: v5e
topology: v5e:2x2
jax: 0.10.0
libtpu: 0.0.40
codegen_flags: <defaults>
</compile_context>

<pallas_src>
import functools

import jax
import jax.numpy as jnp
from jax.experimental import pallas as pl
from jax.experimental.pallas import tpu as pltpu


LEAKY_SLOPE = 0.01   # PyTorch F.leaky_relu default negative_slope
LANE = 128           # TPU lane width: feature dims are padded to this


def _round_up(n, m):
    return ((n + m - 1) // m) * m


def _resident_spec(shape):
    """Whole-array block with a constant index_map: fetched once, stays VMEM-resident.

    Single-buffered (pl.Buffered(1)) so v7x's 64 MiB VMEM is not spent on a second,
    never-used copy of every weight (double-buffering a constant block is pure waste).
    """
    try:
        return pl.BlockSpec(shape, lambda i: (0, 0), pipeline_mode=pl.Buffered(1))
    except (TypeError, AttributeError):
        # Older jax without pipeline_mode / Buffered: fall back to default buffering.
        return pl.BlockSpec(shape, lambda i: (0, 0))


def _mlp_kernel(num_layers, apply_dropout, keep_threshold, inv_keep, x_ref, *refs):
    """Fused MLP tile kernel.

    refs layout:
      [w0, b0, ..., w_{L-1}, b_{L-1}]
      (+ [bits_0, ..., bits_{L-2}]  if apply_dropout)
      + [out_ref]

    Operates on one (TB, 128k) activation tile; weights/biases are whole
    lane-padded arrays pinned in VMEM (constant index_map in the wrapper).
    """
    out_ref = refs[-1]
    param_refs = refs[: 2 * num_layers]
    bits_refs = refs[2 * num_layers: 2 * num_layers + (num_layers - 1)] if apply_dropout else ()

    h = x_ref[...].astype(jnp.float32)
    for layer in range(num_layers):
        w = param_refs[2 * layer][...]              # (in_p, out_p), bf16 by default
        b = param_refs[2 * layer + 1][...]          # (1, out_p), f32, zero-padded
        # MXU matmul in the stored weight dtype, f32 accumulation.
        h = jnp.dot(h.astype(w.dtype), w,
                    preferred_element_type=jnp.float32) + b.astype(jnp.float32)
        if layer != num_layers - 1:
            # leaky_relu fused: 1 mul + 1 max (slope in (0,1) => max == where(h>0,h,s*h))
            h = jnp.maximum(h, LEAKY_SLOPE * h)
            if apply_dropout:
                # keep element iff uniform-uint32 >= p * 2^32  (keep prob = 1 - p)
                keep = bits_refs[layer][...] >= jnp.uint32(keep_threshold)
                h = jnp.where(keep, h * inv_keep, 0.0)
    out_ref[...] = h.astype(out_ref.dtype)


def init_params(key, dims, layers):
    """Deterministic nn.Linear-style init: U(-1/sqrt(fan_in), +1/sqrt(fan_in))."""
    weights, biases = [], []
    for layer in range(layers):
        fan_in, fan_out = dims[layer], dims[layer + 1]
        key, kw, kb = jax.random.split(key, 3)
        bound = 1.0 / float(fan_in) ** 0.5
        # stored as (in, out) == transpose of PyTorch's (out, in) weight
        w = jax.random.uniform(kw, (fan_in, fan_out), jnp.float32, -bound, bound)
        b = jax.random.uniform(kb, (fan_out,), jnp.float32, -bound, bound)
        weights.append(w)
        biases.append(b)
    return weights, biases


def pad_params(weights, biases, lane=LANE, param_dtype=jnp.bfloat16):
    """Zero-pad (in,out) weights / (out,) biases to lane multiples and cast weights to
    `param_dtype` (bf16 by default: native MXU dtype, half the DMA/VMEM of f32).
    Do this ONCE at init time, not per forward call. Biases stay f32 (added to the
    f32 accumulator without any per-step cast)."""
    pw, pb = [], []
    for w, b in zip(weights, biases):
        k, n = w.shape
        kp, np_ = _round_up(k, lane), _round_up(n, lane)
        pw.append(jnp.pad(w, ((0, kp - k), (0, np_ - n))).astype(param_dtype))
        pb.append(jnp.pad(b.reshape(1, -1), ((0, 0), (0, np_ - n))).astype(jnp.float32))
    return pw, pb


def drop_fully_connected_forward(x, padded_weights, padded_biases, out_dim, *,
                                 dropout_p=0.0, mode='eval', seed=0,
                                 block_batch=1024):
    """x: (B, in_dim) f32. padded_weights/biases from pad_params(). Returns (B, out_dim) f32."""
    num_layers = len(padded_weights)
    B, in_dim = x.shape
    in_dim_p = padded_weights[0].shape[0]
    out_dim_p = padded_weights[-1].shape[1]
    hidden_p = [w.shape[1] for w in padded_weights[:-1]]

    if mode == 'train' and not (0.0 <= dropout_p < 1.0):
        # TODO(synk): p == 1.0 (drop everything) not supported; 1/(1-p) is non-finite.
        raise ValueError("dropout_p must be in [0, 1) in train mode")
    apply_dropout = (mode == 'train') and (dropout_p > 0.0) and (num_layers > 1)

    # ---- batch tiling -------------------------------------------------------
    # TB must be a multiple of 8 (sublane constraint). Choose the tile count first
    # so batch padding is minimal (B=513 no longer runs 1024 rows), and guarantee
    # >= 2 grid steps when the batch allows it so the "parallel" axis can shard
    # across v7x's two TensorCores (harmless on 1-TC v5e/v6e).
    B8 = _round_up(B, 8)
    tb_cap = max(8, _round_up(min(block_batch, B8), 8))
    n_tiles = -(-B8 // tb_cap)
    if n_tiles < 2 and B8 >= 16:
        n_tiles = 2
    TB = _round_up(-(-B8 // n_tiles), 8)
    Bp = TB * n_tiles

    x_p = x
    if (Bp, in_dim_p) != (B, in_dim):
        x_p = jnp.pad(x, ((0, Bp - B), (0, in_dim_p - in_dim)))

    # ---- inputs / specs -----------------------------------------------------
    args = [x_p]
    in_specs = [pl.BlockSpec((TB, in_dim_p), lambda i: (i, 0))]
    for w, b in zip(padded_weights, padded_biases):
        args += [w, b]
        in_specs += [_resident_spec(w.shape), _resident_spec(b.shape)]

    keep_threshold = 0
    inv_keep = 1.0
    if apply_dropout:
        keep_threshold = min(int(round(dropout_p * 4294967296.0)), 4294967295)
        inv_keep = float(1.0 / (1.0 - dropout_p))
        keys = jax.random.split(jax.random.PRNGKey(seed), num_layers - 1)
        for l, hp in enumerate(hidden_p):
            bits = jax.random.bits(keys[l], (Bp, hp), dtype=jnp.uint32)
            args.append(bits)
            in_specs.append(pl.BlockSpec((TB, hp), lambda i: (i, 0)))

    kernel = functools.partial(_mlp_kernel, num_layers, apply_dropout,
                               keep_threshold, inv_keep)

    # ---- VMEM budget derived from actual sizes (not a hard-coded constant) ---
    param_bytes = sum(int(a.size) * a.dtype.itemsize
                      for a in args[1: 1 + 2 * num_layers])          # single-buffered
    act_tile_bytes = 2 * TB * (in_dim_p + out_dim_p) * 4             # double-buffered x / out
    bits_tile_bytes = (2 * TB * sum(hidden_p) * 4) if apply_dropout else 0
    vmem_limit = param_bytes + act_tile_bytes + bits_tile_bytes + (4 << 20)  # + headroom
    vmem_limit = int(min(max(vmem_limit, 8 << 20), 128 << 20))
    # TODO(synk): if param_bytes exceeds ~48 MiB (v7x has 64 MiB VMEM per TC), fall back
    # to tiling the widest layer over an extra N/K grid axis instead of full residency.

    flops = 2 * Bp * sum(int(w.shape[0]) * int(w.shape[1]) for w in padded_weights)
    bytes_accessed = int(sum(int(a.size) * a.dtype.itemsize for a in args)
                         + Bp * out_dim_p * 4)

    out_p = pl.pallas_call(
        kernel,
        out_shape=jax.ShapeDtypeStruct((Bp, out_dim_p), jnp.float32),
        grid=(n_tiles,),
        in_specs=in_specs,
        out_specs=pl.BlockSpec((TB, out_dim_p), lambda i: (i, 0)),
        compiler_params=pltpu.CompilerParams(
            dimension_semantics=("parallel",),     # megacore / v7x 2-TC sharding
            vmem_limit_bytes=vmem_limit,
        ),
        cost_estimate=pl.CostEstimate(flops=flops, transcendentals=0,
                                      bytes_accessed=bytes_accessed),
    )(*args)

    return out_p[:B, :out_dim]


def drop_fully_connected_reference(x, weights, biases):
    """Pure-JAX reference (eval mode / dropout disabled) for correctness checks."""
    h = x
    for layer in range(len(weights)):
        h = h @ weights[layer] + biases[layer]
        if layer != len(weights) - 1:
            h = jnp.where(h > 0, h, LEAKY_SLOPE * h)
    return h


if __name__ == "__main__":
    # Small shapes consistent with the module: DropFullyConnected(dims=[32,64,16], layers=2)
    dims = [32, 64, 16]
    layers = 2
    batch = 8

    key = jax.random.PRNGKey(0)
    key, kx = jax.random.split(key)
    x = jax.random.normal(kx, (batch, dims[0]), jnp.float32)

    weights, biases = init_params(key, dims, layers)
    pweights_bf16, pbiases_bf16 = pad_params(weights, biases)                        # bf16 (default)
    pweights_f32, pbiases_f32 = pad_params(weights, biases, param_dtype=jnp.float32) # f32 (tight check)

    ref = drop_fully_connected_reference(x, weights, biases)

    # --- eval-mode forward, f32 weights: tight tolerance vs reference ---
    out_f32 = drop_fully_connected_forward(x, pweights_f32, pbiases_f32, out_dim=dims[-1])
    out_f32 = jax.block_until_ready(out_f32)
    assert out_f32.shape == (batch, dims[-1])
    assert jnp.allclose(out_f32, ref, atol=1e-4, rtol=1e-4), "f32 mismatch vs reference"

    # --- eval-mode forward, bf16 weights (default fast path): loose tolerance ---
    out_bf16 = drop_fully_connected_forward(x, pweights_bf16, pbiases_bf16, out_dim=dims[-1])
    out_bf16 = jax.block_until_ready(out_bf16)
    assert out_bf16.shape == (batch, dims[-1])
    assert jnp.allclose(out_bf16, ref, atol=3e-2, rtol=3e-2), "bf16 mismatch vs reference"

    # --- multi-tile grid path (batch not a multiple of the tile) ---
    key, kx2 = jax.random.split(key)
    x_big = jax.random.normal(kx2, (300, dims[0]), jnp.float32)
    out_big = drop_fully_connected_forward(x_big, pweights_bf16, pbiases_bf16,
                                           out_dim=dims[-1], block_batch=128)
    out_big = jax.block_until_ready(out_big)
    ref_big = drop_fully_connected_reference(x_big, weights, biases)
    assert out_big.shape == (300, dims[-1])
    assert jnp.allclose(out_big, ref_big, atol=3e-2, rtol=3e-2), "mismatch (tiled) vs reference"

    # --- train-mode dropout smoke test (mask from jax.random; distribution-level check) ---
    out_drop = drop_fully_connected_forward(x, pweights_bf16, pbiases_bf16, out_dim=dims[-1],
                                            dropout_p=0.5, mode='train', seed=1234)
    out_drop = jax.block_until_ready(out_drop)
    assert out_drop.shape == (batch, dims[-1])
    assert bool(jnp.all(jnp.isfinite(out_drop)))
    assert not jnp.allclose(out_drop, out_bf16, atol=1e-5, rtol=1e-5)

    print("KERNEL_OK")
</pallas_src>

<mosaic_0001>
module attributes {stable_mosaic.version = 11 : i64} {
  func.func @_mlp_kernel(%arg0: i32, %arg1: memref<8x128xf32, #tpu.memory_space<vmem>>, %arg2: memref<128x128xf32, #tpu.memory_space<vmem>>, %arg3: memref<1x128xf32, #tpu.memory_space<vmem>>, %arg4: memref<128x128xf32, #tpu.memory_space<vmem>>, %arg5: memref<1x128xf32, #tpu.memory_space<vmem>>, %arg6: memref<8x128xf32, #tpu.memory_space<vmem>>) attributes {dimension_semantics = [#tpu.dimension_semantics<parallel>], iteration_bounds = array<i64: 1>, scalar_prefetch = 0 : i64, scratch_operands = 0 : i64, tpu.core_type = #tpu.core_type<tc>, window_params = [{transform_indices = @transform_0, window_bounds = array<i64: 8, 128>}, {pipeline_mode = #tpu.pipeline_mode<synchronous>, transform_indices = @transform_1, window_bounds = array<i64: 128, 128>}, {pipeline_mode = #tpu.pipeline_mode<synchronous>, transform_indices = @transform_2, window_bounds = array<i64: 1, 128>}, {pipeline_mode = #tpu.pipeline_mode<synchronous>, transform_indices = @transform_3, window_bounds = array<i64: 128, 128>}, {pipeline_mode = #tpu.pipeline_mode<synchronous>, transform_indices = @transform_4, window_bounds = array<i64: 1, 128>}, {transform_indices = @transform_5, window_bounds = array<i64: 8, 128>}]} {
    %c0 = arith.constant 0 : index
    %c0_0 = arith.constant 0 : index
    %0 = vector.load %arg1[%c0, %c0_0] : memref<8x128xf32, #tpu.memory_space<vmem>>, vector<8x128xf32>
    %c0_1 = arith.constant 0 : index
    %c0_2 = arith.constant 0 : index
    %1 = vector.load %arg2[%c0_1, %c0_2] : memref<128x128xf32, #tpu.memory_space<vmem>>, vector<128x128xf32>
    %c0_3 = arith.constant 0 : index
    %c0_4 = arith.constant 0 : index
    %2 = vector.load %arg3[%c0_3, %c0_4] : memref<1x128xf32, #tpu.memory_space<vmem>>, vector<1x128xf32>
    %cst = arith.constant dense<0.000000e+00> : vector<8x128xf32>
    %3 = tpu.matmul %0, %1, %cst {dimension_numbers = #tpu.dot_dimension_numbers<[1], [0], [0], [1], [0, 0, 1, 1], [], []>} : vector<8x128xf32>, vector<128x128xf32>, vector<8x128xf32> -> vector<8x128xf32>
    %4 = vector.broadcast %2 : vector<1x128xf32> to vector<8x128xf32>
    %5 = arith.addf %3, %4 : vector<8x128xf32>
    %cst_5 = arith.constant 0.00999999977 : f32
    %6 = vector.broadcast %cst_5 : f32 to vector<8x128xf32>
    %7 = arith.mulf %6, %5 : vector<8x128xf32>
    %8 = arith.maximumf %5, %7 : vector<8x128xf32>
    %c0_6 = arith.constant 0 : index
    %c0_7 = arith.constant 0 : index
    %9 = vector.load %arg4[%c0_6, %c0_7] : memref<128x128xf32, #tpu.memory_space<vmem>>, vector<128x128xf32>
    %c0_8 = arith.constant 0 : index
    %c0_9 = arith.constant 0 : index
    %10 = vector.load %arg5[%c0_8, %c0_9] : memref<1x128xf32, #tpu.memory_space<vmem>>, vector<1x128xf32>
    %cst_10 = arith.constant dense<0.000000e+00> : vector<8x128xf32>
    %11 = tpu.matmul %8, %9, %cst_10 {dimension_numbers = #tpu.dot_dimension_numbers<[1], [0], [0], [1], [0, 0, 1, 1], [], []>} : vector<8x128xf32>, vector<128x128xf32>, vector<8x128xf32> -> vector<8x128xf32>
    %12 = vector.broadcast %10 : vector<1x128xf32> to vector<8x128xf32>
    %13 = arith.addf %11, %12 : vector<8x128xf32>
    %c0_11 = arith.constant 0 : index
    %c0_12 = arith.constant 0 : index
    %14 = vector.load %arg6[%c0_11, %c0_12] : memref<8x128xf32, #tpu.memory_space<vmem>>, vector<8x128xf32>
    tpu.vector_store %arg6[%c0_11, %c0_12], %13 {strides = array<i32>} : memref<8x128xf32, #tpu.memory_space<vmem>>, vector<8x128xf32>,
    return
  }
  func.func @transform_0(%arg0: i32) -> (i32, i32) {
    %c0_i32 = arith.constant 0 : i32
    %c0_i32_0 = arith.constant 0 : i32
    return %arg0, %c0_i32 : i32, i32
  }
  func.func @transform_1(%arg0: i32) -> (i32, i32) {
    %c0_i32 = arith.constant 0 : i32
    %c0_i32_0 = arith.constant 0 : i32
    %c0_i32_1 = arith.constant 0 : i32
    return %c0_i32, %c0_i32_0 : i32, i32
  }
  func.func @transform_2(%arg0: i32) -> (i32, i32) {
    %c0_i32 = arith.constant 0 : i32
    %c0_i32_0 = arith.constant 0 : i32
    %c0_i32_1 = arith.constant 0 : i32
    return %c0_i32, %c0_i32_0 : i32, i32
  }
  func.func @transform_3(%arg0: i32) -> (i32, i32) {
    %c0_i32 = arith.constant 0 : i32
    %c0_i32_0 = arith.constant 0 : i32
    %c0_i32_1 = arith.constant 0 : i32
    return %c0_i32, %c0_i32_0 : i32, i32
  }
  func.func @transform_4(%arg0: i32) -> (i32, i32) {
    %c0_i32 = arith.constant 0 : i32
    %c0_i32_0 = arith.constant 0 : i32
    %c0_i32_1 = arith.constant 0 : i32
    return %c0_i32, %c0_i32_0 : i32, i32
  }
  func.func @transform_5(%arg0: i32) -> (i32, i32) {
    %c0_i32 = arith.constant 0 : i32
    %c0_i32_0 = arith.constant 0 : i32
    return %arg0, %c0_i32 : i32, i32
  }
}

</mosaic_0001>

<llo_original>
// kernel: tpu_custom_call.1
$region0: #{tpu_custom_call.1}
  #allocation0 [shape = 'u32[]', space=smem, size = 0x4, offset = 0x4, fixed_abs, tag = 'smem constant byte address 0x4 - core index']
  #allocation1 [shape = 'u32[72,128]{1,0:T(1,128)}', space=vmem, size = 0x9000, scoped, tag = 'internal scratch']
  %s0 = inlined_call_operand.hbm [shape: f32[8,128], index: 0, kind: input, shape index: {}]
  %s1 = inlined_call_operand.hbm [shape: f32[128,128], index: 1, kind: input, shape index: {}]
  %s2 = inlined_call_operand.vmem [shape: f32[1,128], index: 2, kind: input, shape index: {}]
  %s3 = inlined_call_operand.hbm [shape: f32[128,128], index: 3, kind: input, shape index: {}]
  %s4 = inlined_call_operand.vmem [shape: f32[1,128], index: 4, kind: input, shape index: {}]
  %s5 = inlined_call_operand.hbm [shape: f32[8,128], index: 5, kind: output, shape index: {}]
  %s6 = sld [smem:[#allocation0]]
  $region42: #{tpu_custom_call.1} parent=0
    _
  %s8 = ssub.s32 1, %s6
  %s9 = scalar_select 0, %s8, %s6
  $region1: #{tpu_custom_call.1} parent=0
    #allocation2 [shape = 'u8[4096]{0}', space=vmem, size = 0x1000, scoped, tag = 'input window, operand 0, single buffered']
    #allocation3 [shape = 's32[1]{0}', space=sflag, size = 0x4, scoped, tag = 'scoped memory for tpu_custom_call.1']
    #allocation4 [shape = 's32[1]{0}', space=sflag, size = 0x4, scoped, tag = 'scoped memory for tpu_custom_call.1']
    #allocation5 [shape = 'u8[65536]{0}', space=vmem, size = 0x10000, scoped, tag = 'input window, operand 1, single buffered']
    #allocation6 [shape = 's32[1]{0}', space=sflag, size = 0x4, scoped, tag = 'scoped memory for tpu_custom_call.1']
    #allocation7 [shape = 'u8[65536]{0}', space=vmem, size = 0x10000, scoped, tag = 'input window, operand 3, single buffered']
    #allocation8 [shape = 'u8[4096]{0}', space=vmem, size = 0x1000, scoped, tag = 'output window, operand 0, single buffered']
    %10 = vsyncpa [#allocation3], 0
    %11 = vsyncpa [#allocation6], 0
    %12 = vsyncpa [#allocation4], 0
    // Predicated region
    $region2: #{tpu_custom_call.1} parent=1 // pred_check
      _
    $region3: #{tpu_custom_call.1} parent=1 // pred_check_branch
      %14 = sbr.rel (0) target = $region5
    $region4: #{tpu_custom_call.1} parent=1 // pred_region
      %16 = vsyncadd [#allocation3], 0
      %s18 = sshll.u32 %s0, 4
      %s19 = int_to_ptr.hbm [resolvable:$true] %s18
      %s20 = sshll.u32 [#allocation2], 4
      %s21 = int_to_ptr.vmem [resolvable:$true] %s20
      %23 = dma.hbm_to_vmem [thread:$0]  %s19, 128, %s21, [#allocation3]
    $region5: #{tpu_custom_call.1} parent=1 // pred_fallthru
      _
    // Predicated region
    $region6: #{tpu_custom_call.1} parent=1 // pred_check
      _
    $region7: #{tpu_custom_call.1} parent=1 // pred_check_branch
      %25 = sbr.rel (0) target = $region9
    $region8: #{tpu_custom_call.1} parent=1 // pred_region
      %27 = vsyncadd [#allocation6], 0
      %s28 = sshll.u32 %s1, 4
      %s29 = int_to_ptr.hbm [resolvable:$true] %s28
      %s30 = sshll.u32 [#allocation5], 4
      %s31 = int_to_ptr.vmem [resolvable:$true] %s30
      %36 = dma.hbm_to_vmem [thread:$0]  %s29, 2048, %s31, [#allocation6], 128, 128, 8
    $region9: #{tpu_custom_call.1} parent=1 // pred_fallthru
      _
    // Predicated region
    $region10: #{tpu_custom_call.1} parent=1 // pred_check
      _
    $region11: #{tpu_custom_call.1} parent=1 // pred_check_branch
      %38 = sbr.rel (0) target = $region13
    $region12: #{tpu_custom_call.1} parent=1 // pred_region
      _
    $region13: #{tpu_custom_call.1} parent=1 // pred_fallthru
      _
    // Predicated region
    $region14: #{tpu_custom_call.1} parent=1 // pred_check
      _
    $region15: #{tpu_custom_call.1} parent=1 // pred_check_branch
      %40 = sbr.rel (0) target = $region17
    $region16: #{tpu_custom_call.1} parent=1 // pred_region
      %42 = vsyncadd [#allocation6], 0
      %s43 = sshll.u32 %s3, 4
      %s44 = int_to_ptr.hbm [resolvable:$true] %s43
      %s45 = sshll.u32 [#allocation7], 4
      %s46 = int_to_ptr.vmem [resolvable:$true] %s45
      %51 = dma.hbm_to_vmem [thread:$0]  %s44, 2048, %s46, [#allocation6], 128, 128, 8
    $region17: #{tpu_custom_call.1} parent=1 // pred_fallthru
      _
    // Predicated region
    $region18: #{tpu_custom_call.1} parent=1 // pred_check
      _
    $region19: #{tpu_custom_call.1} parent=1 // pred_check_branch
      %53 = sbr.rel (0) target = $region21
    $region20: #{tpu_custom_call.1} parent=1 // pred_region
      _
    $region21: #{tpu_custom_call.1} parent=1 // pred_fallthru
      _
    // Predicated region
    $region22: #{tpu_custom_call.1} parent=1 // pred_check
      _
    $region23: #{tpu_custom_call.1} parent=1 // pred_check_branch
      %55 = sbr.rel (0) target = $region25
    $region24: #{tpu_custom_call.1} parent=1 // pred_region
      %57 = dma.done [#allocation3], 128
    $region25: #{tpu_custom_call.1} parent=1 // pred_fallthru
      _
    // Predicated region
    $region26: #{tpu_custom_call.1} parent=1 // pred_check
      _
    $region27: #{tpu_custom_call.1} parent=1 // pred_check_branch
      %59 = sbr.rel (0) target = $region29
    $region28: #{tpu_custom_call.1} parent=1 // pred_region
      %61 = dma.done [#allocation6], 2048
    $region29: #{tpu_custom_call.1} parent=1 // pred_fallthru
      _
    // Predicated region
    $region30: #{tpu_custom_call.1} parent=1 // pred_check
      _
    $region31: #{tpu_custom_call.1} parent=1 // pred_check_branch
      %63 = sbr.rel (0) target = $region33
    $region32: #{tpu_custom_call.1} parent=1 // pred_region
      %65 = dma.done [#allocation6], 2048
    $region33: #{tpu_custom_call.1} parent=1 // pred_fallthru
      _
    %v66 = vld [vmem:[#allocation2] sm:$0xff]
    %v67 = vld [vmem:[#allocation5] sm:$0xff]
    %v68 = vld [vmem:[#allocation5 + $0x8] sm:$0xff]
    %v69 = vld [vmem:[#allocation5 + $0x10] sm:$0xff]
    %v70 = vld [vmem:[#allocation5 + $0x18] sm:$0xff]
    %v71 = vld [vmem:[#allocation5 + $0x20] sm:$0xff]
    %v72 = vld [vmem:[#allocation5 + $0x28] sm:$0xff]
    %v73 = vld [vmem:[#allocation5 + $0x30] sm:$0xff]
    %v74 = vld [vmem:[#allocation5 + $0x38] sm:$0xff]
    %v75 = vld [vmem:[#allocation5 + $0x40] sm:$0xff]
    %v76 = vld [vmem:[#allocation5 + $0x48] sm:$0xff]
    %v77 = vld [vmem:[#allocation5 + $0x50] sm:$0xff]
    %v78 = vld [vmem:[#allocation5 + $0x58] sm:$0xff]
    %v79 = vld [vmem:[#allocation5 + $0x60] sm:$0xff]
    %v80 = vld [vmem:[#allocation5 + $0x68] sm:$0xff]
    %v81 = vld [vmem:[#allocation5 + $0x70] sm:$0xff]
    %v82 = vld [vmem:[#allocation5 + $0x78] sm:$0xff]
    %v83 = vld [vmem:[%s2] sm:$0x1]
    %v85 = vperm.slane %v83, 0
    %87 = vmatpush.msra.mxu0 %v82
    %88 = vmatpush.msra.mxu0 %v81
    %89 = vmatpush.msra.mxu0 %v80
    %90 = vmatpush.msra.mxu0 %v79
    %91 = vmatpush.msra.mxu0 %v78
    %92 = vmatpush.msra.mxu0 %v77
    %93 = vmatpush.msra.mxu0 %v76
    %94 = vmatpush.msra.mxu0 %v75
    %95 = vmatpush.msra.mxu0 %v74
    %96 = vmatpush.msra.mxu0 %v73
    %97 = vmatpush.msra.mxu0 %v72
    %98 = vmatpush.msra.mxu0 %v71
    %99 = vmatpush.msra.mxu0 %v70
    %100 = vmatpush.msra.mxu0 %v69
    %101 = vmatpush.msra.mxu0 %v68
    %102 = vmatpush.msra.mxu0 %v67
    %103 = vmatmul.f32.gmra.mxu0 %v66
    %v104 = vpop.f32.mrf.mxu0
    %v105 = vadd.f32 %v85, %v104
    %106 = vdwg.mxu0
    %v107 = vmul.f32 %v105, 0.01
    %v108 = vmax.f32 %v105, %v107
    %v109 = vld [vmem:[#allocation7] sm:$0xff]
    %v110 = vld [vmem:[#allocation7 + $0x8] sm:$0xff]
    %v111 = vld [vmem:[#allocation7 + $0x10] sm:$0xff]
    %v112 = vld [vmem:[#allocation7 + $0x18] sm:$0xff]
    %v113 = vld [vmem:[#allocation7 + $0x20] sm:$0xff]
    %v114 = vld [vmem:[#allocation7 + $0x28] sm:$0xff]
    %v115 = vld [vmem:[#allocation7 + $0x30] sm:$0xff]
    %v116 = vld [vmem:[#allocation7 + $0x38] sm:$0xff]
    %v117 = vld [vmem:[#allocation7 + $0x40] sm:$0xff]
    %v118 = vld [vmem:[#allocation7 + $0x48] sm:$0xff]
    %v119 = vld [vmem:[#allocation7 + $0x50] sm:$0xff]
    %v120 = vld [vmem:[#allocation7 + $0x58] sm:$0xff]
    %v121 = vld [vmem:[#allocation7 + $0x60] sm:$0xff]
    %v122 = vld [vmem:[#allocation7 + $0x68] sm:$0xff]
    %v123 = vld [vmem:[#allocation7 + $0x70] sm:$0xff]
    %v124 = vld [vmem:[#allocation7 + $0x78] sm:$0xff]
    %v125 = vld [vmem:[%s4] sm:$0x1]
    %v127 = vperm.slane %v125, 0
    %129 = vmatpush.msra.mxu0 %v124
    %130 = vmatpush.msra.mxu0 %v123
    %131 = vmatpush.msra.mxu0 %v122
    %132 = vmatpush.msra.mxu0 %v121
    %133 = vmatpush.msra.mxu0 %v120
    %134 = vmatpush.msra.mxu0 %v119
    %135 = vmatpush.msra.mxu0 %v118
    %136 = vmatpush.msra.mxu0 %v117
    %137 = vmatpush.msra.mxu0 %v116
    %138 = vmatpush.msra.mxu0 %v115
    %139 = vmatpush.msra.mxu0 %v114
    %140 = vmatpush.msra.mxu0 %v113
    %141 = vmatpush.msra.mxu0 %v112
    %142 = vmatpush.msra.mxu0 %v111
    %143 = vmatpush.msra.mxu0 %v110
    %144 = vmatpush.msra.mxu0 %v109
    %145 = vmatmul.f32.gmra.mxu0 %v108
    %v146 = vpop.f32.mrf.mxu0
    %v147 = vadd.f32 %v127, %v146
    %148 = vdwg.mxu0
    %149 = vst [vmem:[#allocation8] sm:$0xff] %v147
    // Predicated region
    $region34: #{tpu_custom_call.1} parent=1 // pred_check
      _
    $region35: #{tpu_custom_call.1} parent=1 // pred_check_branch
      %151 = sbr.rel (0) target = $region37
    $region36: #{tpu_custom_call.1} parent=1 // pred_region
      %153 = vsyncadd [#allocation4], 0
      %s155 = sshll.u32 [#allocation8], 4
      %s156 = int_to_ptr.vmem [resolvable:$true] %s155
      %s157 = sshll.u32 %s5, 4
      %s158 = int_to_ptr.hbm [resolvable:$true] %s157
      %160 = dma.vmem_to_hbm [thread:$0]  %s156, 128, %s158, [#allocation4]
    $region37: #{tpu_custom_call.1} parent=1 // pred_fallthru
      _
    // Predicated region
    $region38: #{tpu_custom_call.1} parent=1 // pred_check
      _
    $region39: #{tpu_custom_call.1} parent=1 // pred_check_branch
      %162 = sbr.rel (0) target = $region41
    $region40: #{tpu_custom_call.1} parent=1 // pred_region
      %164 = dma.done [#allocation4], 128
    $region41: #{tpu_custom_call.1} parent=1 // pred_fallthru
      _
    %165 = vsyncpa [#allocation3], 1
    %166 = vsyncpa [#allocation6], 1
    %167 = vsyncpa [#allocation4], 1

</llo_original>
